<compile_context>
chip_gen: v7x
topology: tpu7x:2x2x1
jax: 0.10.0
libtpu: 0.0.40
codegen_flags: <defaults>
</compile_context>

<pallas_src>
import math

import jax
import jax.numpy as jnp
from jax.experimental import pallas as pl
from jax.experimental.pallas import tpu as pltpu

_LANE = 128
_SUBLANE = 8
# ~2 MiB tiles: big enough to approach HBM roofline, small enough that the
# double-buffered in+out pipeline (~4x tile) fits every chip's scoped VMEM.
_TARGET_TILE_BYTES = 2 * 1024 * 1024


def _copy_kernel(x_ref, o_ref):
    # Contiguous copy of one lane/sublane-dense tile (VMEM -> VMEM).
    o_ref[...] = x_ref[...]


def _resolve_shape(flat, shape):
    """Resolve a possible -1 entry like torch.view does."""
    shape = list(shape)
    if -1 in shape:
        idx = shape.index(-1)
        known = math.prod([s for s in shape if s != -1])
        assert known > 0 and flat % known == 0, "cannot infer -1 dimension"
        shape[idx] = flat // known
    assert math.prod(shape) == flat, (
        f"target shape {tuple(shape)} incompatible with {flat} elements"
    )
    return tuple(shape)


def _choose_2d_layout(total, itemsize):
    """Pick a lane/sublane-dense (rows, cols) factorization of `total` and a
    row-tile size for the copy grid.  Returns (rows, cols, tile_rows)."""
    cols = 0
    # Prefer a factorization whose row count is a multiple of 8 (sublane-dense)
    # with a large lane-dense column count.
    for c in (4096, 2048, 1024, 512, 256, 128):
        if total % c == 0 and (total // c) % _SUBLANE == 0:
            cols = c
            break
    if cols == 0:
        # Lane-dense, but row count not 8-divisible.
        for c in (4096, 2048, 1024, 512, 256, 128):
            if total % c == 0:
                cols = c
                break
    if cols == 0:
        # TODO(synk): totals not divisible by 128 fall back to a single
        # (1, total) full-array block (correct, but masked/partial stores).
        return 1, total, 1

    rows = total // cols
    # Row tile: multiple of 8, sized so one tile is ~2 MiB (or the whole slab).
    tile_rows = (_TARGET_TILE_BYTES // (cols * itemsize)) // _SUBLANE * _SUBLANE
    tile_rows = max(_SUBLANE, tile_rows)
    tile_rows = min(tile_rows, rows)
    if tile_rows % _SUBLANE != 0:
        # Only possible when rows < 8: use the full array dim (still legal).
        tile_rows = rows
    return rows, cols, tile_rows


def reshape_forward(x, target_shape):
    """Pallas equivalent of Reshape(*target_shape).forward(x)."""
    b = x.shape[0]
    flat = math.prod(x.shape[1:])
    target_shape = _resolve_shape(flat, target_shape)

    total = b * flat
    itemsize = jnp.dtype(x.dtype).itemsize
    rows, cols, tile_rows = _choose_2d_layout(total, itemsize)

    # Glue: row-major flatten of the whole tensor into a lane-dense 2D slab
    # (metadata only — identical element order to torch's contiguous layout).
    x2d = x.reshape(rows, cols)

    n_blocks = pl.cdiv(rows, tile_rows)

    # Hot path: contiguous copy inside the Pallas kernel, large dense tiles,
    # grid decoupled from the batch dimension.
    y2d = pl.pallas_call(
        _copy_kernel,
        out_shape=jax.ShapeDtypeStruct((rows, cols), x.dtype),
        grid_spec=pltpu.PrefetchScalarGridSpec(
            num_scalar_prefetch=0,
            grid=(n_blocks,),
            in_specs=[pl.BlockSpec((tile_rows, cols), lambda i: (i, 0))],
            out_specs=pl.BlockSpec((tile_rows, cols), lambda i: (i, 0)),
        ),
        compiler_params=pltpu.CompilerParams(
            dimension_semantics=("parallel",),
        ),
        cost_estimate=pl.CostEstimate(
            flops=0,
            transcendentals=0,
            bytes_accessed=2 * total * itemsize,
        ),
    )(x2d)

    # Glue: re-label dimensions to the requested target shape (metadata only).
    return y2d.reshape((b,) + target_shape)


if __name__ == "__main__":
    key = jax.random.PRNGKey(0)
    # Small shapes consistent with a typical use of Reshape after conv:
    # NCHW input (2, 4, 16, 16) -> Reshape(4, 256) -> output (2, 4, 256).
    x = jax.random.normal(key, (2, 4, 16, 16), dtype=jnp.float32)
    target_shape = (4, 256)

    y = reshape_forward(x, target_shape)
    y = jax.block_until_ready(y)

    # Reference check against a plain JAX reshape (same semantics as torch.view
    # on a contiguous tensor).
    ref = x.reshape((x.shape[0],) + target_shape)
    assert y.shape == (2, 4, 256), y.shape
    assert y.dtype == x.dtype
    assert bool(jnp.array_equal(y, ref)), "mismatch vs reference reshape"

    print("KERNEL_OK")
</pallas_src>

<mosaic_0001>
module attributes {stable_mosaic.version = 11 : i64} {
  func.func @_copy_kernel(%arg0: i32, %arg1: memref<8x256xf32, #tpu.memory_space<vmem>>, %arg2: memref<8x256xf32, #tpu.memory_space<vmem>>) attributes {dimension_semantics = [#tpu.dimension_semantics<parallel>], iteration_bounds = array<i64: 1>, scalar_prefetch = 0 : i64, scratch_operands = 0 : i64, tpu.core_type = #tpu.core_type<tc>, window_params = [{transform_indices = @transform_0, window_bounds = array<i64: 8, 256>}, {transform_indices = @transform_1, window_bounds = array<i64: 8, 256>}]} {
    %c0 = arith.constant 0 : index
    %c0_0 = arith.constant 0 : index
    %0 = vector.load %arg1[%c0, %c0_0] : memref<8x256xf32, #tpu.memory_space<vmem>>, vector<8x256xf32>
    %c0_1 = arith.constant 0 : index
    %c0_2 = arith.constant 0 : index
    %1 = vector.load %arg2[%c0_1, %c0_2] : memref<8x256xf32, #tpu.memory_space<vmem>>, vector<8x256xf32>
    tpu.vector_store %arg2[%c0_1, %c0_2], %0 {strides = array<i32>} : memref<8x256xf32, #tpu.memory_space<vmem>>, vector<8x256xf32>,
    return
  }
  func.func @transform_0(%arg0: i32) -> (i32, i32) {
    %c0_i32 = arith.constant 0 : i32
    %c0_i32_0 = arith.constant 0 : i32
    return %arg0, %c0_i32 : i32, i32
  }
  func.func @transform_1(%arg0: i32) -> (i32, i32) {
    %c0_i32 = arith.constant 0 : i32
    %c0_i32_0 = arith.constant 0 : i32
    return %arg0, %c0_i32 : i32, i32
  }
}

</mosaic_0001>

<llo_original>
// kernel: tpu_custom_call.1
$region0: #{tpu_custom_call.1}
  #allocation0 [shape = 'u32[]', space=smem, size = 0x4, offset = 0x4, fixed_abs, tag = 'smem constant byte address 0x4 - core index']
  #allocation1 [shape = 'u32[144,128]{1,0:T(1,128)}', space=vmem, size = 0x12000, scoped, tag = 'internal scratch']
  %s0 = inlined_call_operand.hbm [shape: f32[8,256], index: 0, kind: input, shape index: {}]
  %s1 = inlined_call_operand.hbm [shape: f32[8,256], index: 1, kind: output, shape index: {}]
  %s2 = sld [smem:[#allocation0]]
  $region18: #{tpu_custom_call.1} parent=0
    _
  %s4 = ssub.s32 1, %s2
  %s5 = scalar_select 0, %s4, %s2
  $region1: #{tpu_custom_call.1} parent=0
    #allocation2 [shape = 'u8[8192]{0}', space=vmem, size = 0x2000, scoped, tag = 'input window, operand 0, single buffered']
    #allocation3 [shape = 's32[1]{0}', space=sflag, size = 0x4, scoped, tag = 'scoped memory for tpu_custom_call.1']
    #allocation4 [shape = 's32[1]{0}', space=sflag, size = 0x4, scoped, tag = 'scoped memory for tpu_custom_call.1']
    #allocation5 [shape = 'u8[8192]{0}', space=vmem, size = 0x2000, scoped, tag = 'output window, operand 0, single buffered']
    %6 = vsyncpa [#allocation3], 0
    %7 = vsyncpa [#allocation4], 0
    // Predicated region
    $region2: #{tpu_custom_call.1} parent=1 // pred_check
      _
    $region3: #{tpu_custom_call.1} parent=1 // pred_check_branch
      %9 = sbr.rel (0) target = $region5
    $region4: #{tpu_custom_call.1} parent=1 // pred_region
      %s11 = ssub.s32 256, 256
      %12 = vsyncadd [#allocation3], %s11
      %s14 = sshll.u32 [#allocation2], 4
      %s15 = int_to_ptr.vmem [resolvable:$true] %s14
      %17 = dma.hbm_to_vmem [thread:$0]  %s0, 256, %s15, [#allocation3]
    $region5: #{tpu_custom_call.1} parent=1 // pred_fallthru
      _
    // Predicated region
    $region6: #{tpu_custom_call.1} parent=1 // pred_check
      _
    $region7: #{tpu_custom_call.1} parent=1 // pred_check_branch
      %19 = sbr.rel (0) target = $region9
    $region8: #{tpu_custom_call.1} parent=1 // pred_region
      %20 = dma.done [#allocation3], 256
    $region9: #{tpu_custom_call.1} parent=1 // pred_fallthru
      _
    %v21 = vld [vmem:[#allocation2] sm:$0xff]
    %v22 = vld [vmem:[#allocation2 + $0x8] sm:$0xff]
    %23 = vst [vmem:[#allocation5] sm:$0xff] %v21
    %24 = vst [vmem:[#allocation5 + $0x8] sm:$0xff] %v22
    // Predicated region
    $region10: #{tpu_custom_call.1} parent=1 // pred_check
      _
    $region11: #{tpu_custom_call.1} parent=1 // pred_check_branch
      %26 = sbr.rel (0) target = $region13
    $region12: #{tpu_custom_call.1} parent=1 // pred_region
      %s28 = ssub.s32 256, 256
      %29 = vsyncadd [#allocation4], %s28
      %s31 = sshll.u32 [#allocation5], 4
      %s32 = int_to_ptr.vmem [resolvable:$true] %s31
      %34 = dma.vmem_to_hbm [thread:$0]  %s32, 256, %s1, [#allocation4]
    $region13: #{tpu_custom_call.1} parent=1 // pred_fallthru
      _
    // Predicated region
    $region14: #{tpu_custom_call.1} parent=1 // pred_check
      _
    $region15: #{tpu_custom_call.1} parent=1 // pred_check_branch
      %36 = sbr.rel (0) target = $region17
    $region16: #{tpu_custom_call.1} parent=1 // pred_region
      %37 = dma.done [#allocation4], 256
    $region17: #{tpu_custom_call.1} parent=1 // pred_fallthru
      _
    %38 = vsyncpa [#allocation3], 1
    %39 = vsyncpa [#allocation4], 1

</llo_original>
